<compile_context>
chip_gen: v6e
topology: v6e:2x2x1
jax: 0.10.0
libtpu: 0.0.40
codegen_flags: <defaults>
</compile_context>

<pallas_src>
import functools

import jax
import jax.numpy as jnp
import numpy as np
from jax.experimental import pallas as pl
from jax.experimental.pallas import tpu as pltpu


def _round_up(x, m):
    return ((x + m - 1) // m) * m


def _pick_tb(b):
    # Whole (small) batch in one block; for big batches tile in multiples of 8
    # sublanes.  256 rows x (L+4) x 128 lanes x 4B x 2 buffers stays far below
    # v7x's 64 MiB VMEM (and trivially below v5e/v6e's 128 MiB).
    if b <= 256:
        return b
    for tb in (256, 128, 64, 32, 16, 8):
        if b % tb == 0:
            return tb
    return b


def _markov_nofeatures_kernel(n_emb, n_valid,
                              x_ref,      # VMEM (TB, L, N)   lookback on sublanes
                              emb_ref,    # VMEM (TB, E)
                              xmark_ref,  # VMEM (TB, NP)
                              keep_ref,   # VMEM (TB, NP)     1.0 keep / 0.0 drop (pad lanes 0)
                              w1_ref,     # VMEM (L, N)       fc1 weight, lane-broadcast
                              w2a_ref,    # VMEM (N, NP)      fc2 weight ("out" cols) * fc3_w0
                              w2b_ref,    # VMEM (E, NP)      fc2 weight (emb cols)  * fc3_w0
                              bias_ref,   # VMEM (1, NP)      folded fc1_b/fc2_b/fc3 scalars
                              xdist_ref,  # VMEM (1, NP)      x_dist * fc3_w1
                              out_ref):   # VMEM (TB, NP)
    # fc1: Linear(lookback, 1) -> reduce over L (sublane axis), N stays on lanes.
    x = x_ref[...]                                             # (TB, L, N)
    out1 = jnp.sum(x * w1_ref[...][None, :, :], axis=1)        # (TB, N)  (bias folded)

    # fc2 "out" half on the MXU (output lanes padded to NP for lane-dense h).
    h = jnp.dot(out1, w2a_ref[...],
                preferred_element_type=jnp.float32) + bias_ref[...]   # (TB, NP)

    # fc2 embedding half: E unrolled VPU broadcast-FMAs (no MXU round trip).
    emb = emb_ref[...]                                         # (TB, E)
    w2b = w2b_ref[...]                                         # (E, NP)
    for e in range(n_emb):
        h = h + emb[:, e:e + 1] * w2b[e:e + 1, :]

    # fc3 (scalars folded) + markov prior.
    z = h + xdist_ref[...] + xmark_ref[...]                    # (TB, NP)

    # Exclude padded lanes from softmax statistics so the 1e-12 L1 clamp below
    # behaves exactly like the unpadded PyTorch reference.
    lane = jax.lax.broadcasted_iota(jnp.int32, z.shape, 1)
    z = jnp.where(lane < n_valid, z, -1e30)

    # softmax(dim=1) -> masked_fill(mask, 0) -> L1 normalize(dim=1).
    zmax = jnp.max(z, axis=1, keepdims=True)
    ez = jnp.exp(z - zmax)
    # approx reciprocal: its relative error cancels in the L1 renorm below.
    p = ez * pl.reciprocal(jnp.sum(ez, axis=1, keepdims=True), approx=True)
    p = p * keep_ref[...]                                      # masked_fill(mask, 0)
    denom = jnp.maximum(jnp.sum(p, axis=1, keepdims=True), 1e-12)   # p >= 0, abs redundant
    out_ref[...] = (p * pl.reciprocal(denom)).astype(out_ref.dtype)


def prepare_params(raw, *, lane_multiple=128):
    """One-time parameter preparation (padding / splitting / scalar folding)."""
    fc2_w = jnp.asarray(raw["fc2_w"], jnp.float32)             # (N, N+E), PyTorch (out,in)
    N = fc2_w.shape[0]
    E = fc2_w.shape[1] - N
    NP = _round_up(N, lane_multiple)
    pad = NP - N

    w1 = jnp.asarray(raw["fc1_w"], jnp.float32)                # (L,)  Linear(L,1).weight row
    L = w1.shape[0]
    b1 = jnp.asarray(raw["fc1_b"], jnp.float32)[0]
    b2 = jnp.asarray(raw["fc2_b"], jnp.float32)                # (N,)
    w30 = jnp.asarray(raw["fc3_w"], jnp.float32)[0, 0]
    w31 = jnp.asarray(raw["fc3_w"], jnp.float32)[0, 1]
    b3 = jnp.asarray(raw["fc3_b"], jnp.float32)[0]

    # fc2 input order is [out(N), emb(E)]  -> split weight column-wise.
    A = fc2_w[:, :N].T                                         # (N, N)
    Bm = fc2_w[:, N:].T                                        # (E, N)

    # Fold fc3_w0 into the fc2 weights, and fc1_b / fc2_b / fc3_b into one bias:
    #   z = ((out_raw + b1) @ A + emb @ Bm + b2) * w30 + x_dist * w31 + b3 + markov
    #     = out_raw @ (A*w30) + emb @ (Bm*w30)
    #       + [b2*w30 + b3 + b1*colsum(A*w30)] + x_dist*w31 + markov
    w2a_eff = A * w30                                          # (N, N)
    w2b_eff = Bm * w30                                         # (E, N)
    bias_eff = b2 * w30 + b3 + b1 * jnp.sum(w2a_eff, axis=0)   # (N,)

    return {
        "emb_table": jnp.asarray(raw["emb_table"], jnp.float32),           # (NW, E)
        "w1": jnp.broadcast_to(w1.reshape(L, 1), (L, N)).astype(jnp.float32),
        "w2a": jnp.pad(w2a_eff, ((0, 0), (0, pad))),                        # (N, NP)
        "w2b": jnp.pad(w2b_eff, ((0, 0), (0, pad))),                        # (E, NP)
        "bias": jnp.pad(bias_eff, (0, pad)).reshape(1, NP),                 # (1, NP)
        "w31": w31,                                                         # ()
    }


@jax.jit
def _forward_impl(prep, x, x_dist, x_markov, x_week, x_mask):
    B, L, N = x.shape
    NP = prep["w2a"].shape[1]
    E = prep["w2b"].shape[0]
    pad = NP - N
    TB = _pick_tb(B)
    grid = (B // TB,)

    x = x.astype(jnp.float32)                                  # (B, L, N) -- no transpose
    emb = prep["emb_table"][x_week]                            # (B, E)
    xdist_eff = jnp.pad(x_dist.astype(jnp.float32) * prep["w31"], (0, pad)).reshape(1, NP)
    xmark_p = jnp.pad(x_markov.astype(jnp.float32), ((0, 0), (0, pad)))
    keep_p = jnp.pad((x_mask == 0).astype(jnp.float32), ((0, 0), (0, pad)))

    def tile_spec(block_shape):
        nz = len(block_shape) - 1
        return pl.BlockSpec(block_shape, lambda i, _nz=nz: (i,) + (0,) * _nz)

    def resident_spec(shape):
        nd = len(shape)
        return pl.BlockSpec(shape, lambda i, _nd=nd: (0,) * _nd)

    cost = pl.CostEstimate(
        flops=int(2 * B * N * NP + 2 * B * L * N + 2 * B * E * NP + 12 * B * NP),
        transcendentals=int(B * NP + 2 * B),
        bytes_accessed=int(4 * (x.size + emb.size + xmark_p.size + keep_p.size
                                + prep["w1"].size + prep["w2a"].size + prep["w2b"].size
                                + 2 * NP + B * NP)),
    )

    kernel = functools.partial(_markov_nofeatures_kernel, E, N)

    out = pl.pallas_call(
        kernel,
        out_shape=jax.ShapeDtypeStruct((B, NP), jnp.float32),
        grid=grid,
        in_specs=[
            tile_spec((TB, L, N)),          # x
            tile_spec((TB, E)),             # emb
            tile_spec((TB, NP)),            # x_markov (padded)
            tile_spec((TB, NP)),            # keep mask (padded with zeros)
            resident_spec(prep["w1"].shape),
            resident_spec(prep["w2a"].shape),
            resident_spec(prep["w2b"].shape),
            resident_spec(prep["bias"].shape),
            resident_spec(xdist_eff.shape),
        ],
        out_specs=tile_spec((TB, NP)),
        compiler_params=pltpu.CompilerParams(dimension_semantics=("parallel",)),
        cost_estimate=cost,
    )(x, emb, xmark_p, keep_p,
      prep["w1"], prep["w2a"], prep["w2b"], prep["bias"], xdist_eff)

    return out[:, :N]


def markov_no_features_forward(prep, x, x_dist, x_features, x_markov, x_week, x_mask):
    """Same argument order as MarkovNoFeatures.forward; x_features unused."""
    del x_features
    return _forward_impl(prep, x, x_dist, x_markov, x_week, x_mask)


def reference_forward(params, x, x_dist, x_features, x_markov, x_week, x_mask):
    """Pure-JAX re-implementation of MarkovNoFeatures.forward (default flags)."""
    out = jnp.einsum("bln,l->bn", x, params["fc1_w"]) + params["fc1_b"][0]
    emb = params["emb_table"][x_week]
    feat = jnp.concatenate([out, emb], axis=1)
    h = feat @ params["fc2_w"].T + params["fc2_b"]
    z = (h * params["fc3_w"][0, 0] + x_dist[None, :] * params["fc3_w"][0, 1]
         + params["fc3_b"][0] + x_markov)
    p = jax.nn.softmax(z, axis=1)
    p = jnp.where(x_mask != 0, 0.0, p)
    return p / jnp.maximum(jnp.sum(jnp.abs(p), axis=1, keepdims=True), 1e-12)


if __name__ == "__main__":
    # Small shapes consistent with the module defaults.
    B, L, N, E, NW, NF = 2, 8, 74, 4, 7, 2

    key = jax.random.PRNGKey(0)
    ks = jax.random.split(key, 12)

    params = {
        "emb_table": 0.1 * jax.random.normal(ks[0], (NW, E), jnp.float32),
        "fc1_w": 0.1 * jax.random.normal(ks[1], (L,), jnp.float32),        # Linear(L,1).weight row
        "fc1_b": 0.1 * jax.random.normal(ks[2], (1,), jnp.float32),
        "fc2_w": 0.1 * jax.random.normal(ks[3], (N, N + E), jnp.float32),  # Linear(E+N, N).weight
        "fc2_b": 0.1 * jax.random.normal(ks[4], (N,), jnp.float32),
        "fc3_w": 0.1 * jax.random.normal(ks[5], (1, 2), jnp.float32),      # Linear(2, 1).weight
        "fc3_b": 0.1 * jax.random.normal(ks[6], (1,), jnp.float32),
    }

    x = jax.random.normal(ks[7], (B, L, N), jnp.float32)
    x_dist = jax.random.normal(ks[8], (N,), jnp.float32)
    x_features = jax.random.normal(ks[9], (B, NF), jnp.float32)   # unused by NoFeatures
    x_markov = jax.random.normal(ks[10], (B, N), jnp.float32)
    x_week = jax.random.randint(ks[11], (B,), 0, NW)
    x_mask = (jax.random.uniform(jax.random.PRNGKey(123), (B, N)) < 0.2).astype(jnp.float32)

    prep = prepare_params(params)                                  # one-time prep (hoisted)
    y = markov_no_features_forward(prep, x, x_dist, x_features, x_markov, x_week, x_mask)
    y = jax.block_until_ready(y)

    y_ref = reference_forward(params, x, x_dist, x_features, x_markov, x_week, x_mask)
    np.testing.assert_allclose(np.asarray(y), np.asarray(y_ref), rtol=3e-5, atol=1e-6)

    # TODO(synk): decision_focused=True branch (-log_softmax + masked_fill 1e8) not wired up;
    # default (decision_focused=False) path is what the kernel implements.
    print("KERNEL_OK")
</pallas_src>

<mosaic_0001>
module attributes {stable_mosaic.version = 11 : i64} {
  func.func @_markov_nofeatures_kernel(%arg0: i32, %arg1: memref<2x8x74xf32, #tpu.memory_space<vmem>>, %arg2: memref<2x4xf32, #tpu.memory_space<vmem>>, %arg3: memref<2x128xf32, #tpu.memory_space<vmem>>, %arg4: memref<2x128xf32, #tpu.memory_space<vmem>>, %arg5: memref<8x74xf32, #tpu.memory_space<vmem>>, %arg6: memref<74x128xf32, #tpu.memory_space<vmem>>, %arg7: memref<4x128xf32, #tpu.memory_space<vmem>>, %arg8: memref<1x128xf32, #tpu.memory_space<vmem>>, %arg9: memref<1x128xf32, #tpu.memory_space<vmem>>, %arg10: memref<2x128xf32, #tpu.memory_space<vmem>>) attributes {dimension_semantics = [#tpu.dimension_semantics<parallel>], iteration_bounds = array<i64: 1>, scalar_prefetch = 0 : i64, scratch_operands = 0 : i64, tpu.core_type = #tpu.core_type<tc>, window_params = [{transform_indices = @transform_0, window_bounds = array<i64: 2, 8, 74>}, {transform_indices = @transform_1, window_bounds = array<i64: 2, 4>}, {transform_indices = @transform_2, window_bounds = array<i64: 2, 128>}, {transform_indices = @transform_3, window_bounds = array<i64: 2, 128>}, {pipeline_mode = #tpu.pipeline_mode<synchronous>, transform_indices = @transform_4, window_bounds = array<i64: 8, 74>}, {pipeline_mode = #tpu.pipeline_mode<synchronous>, transform_indices = @transform_5, window_bounds = array<i64: 74, 128>}, {pipeline_mode = #tpu.pipeline_mode<synchronous>, transform_indices = @transform_6, window_bounds = array<i64: 4, 128>}, {pipeline_mode = #tpu.pipeline_mode<synchronous>, transform_indices = @transform_7, window_bounds = array<i64: 1, 128>}, {pipeline_mode = #tpu.pipeline_mode<synchronous>, transform_indices = @transform_8, window_bounds = array<i64: 1, 128>}, {transform_indices = @transform_9, window_bounds = array<i64: 2, 128>}]} {
    %c0 = arith.constant 0 : index
    %c0_0 = arith.constant 0 : index
    %c0_1 = arith.constant 0 : index
    %0 = vector.load %arg1[%c0, %c0_0, %c0_1] : memref<2x8x74xf32, #tpu.memory_space<vmem>>, vector<2x8x74xf32>
    %c0_2 = arith.constant 0 : index
    %c0_3 = arith.constant 0 : index
    %1 = vector.load %arg5[%c0_2, %c0_3] : memref<8x74xf32, #tpu.memory_space<vmem>>, vector<8x74xf32>
    %2 = vector.shape_cast %1 : vector<8x74xf32> to vector<1x8x74xf32>
    %3 = vector.broadcast %2 : vector<1x8x74xf32> to vector<2x8x74xf32>
    %4 = arith.mulf %0, %3 : vector<2x8x74xf32>
    %cst = arith.constant dense<0.000000e+00> : vector<2x74xf32>
    %5 = vector.multi_reduction <add>, %4, %cst [1] : vector<2x8x74xf32> to vector<2x74xf32>
    %c0_4 = arith.constant 0 : index
    %c0_5 = arith.constant 0 : index
    %6 = vector.load %arg6[%c0_4, %c0_5] : memref<74x128xf32, #tpu.memory_space<vmem>>, vector<74x128xf32>
    %cst_6 = arith.constant dense<0.000000e+00> : vector<2x128xf32>
    %7 = tpu.matmul %5, %6, %cst_6 {dimension_numbers = #tpu.dot_dimension_numbers<[1], [0], [0], [1], [0, 0, 1, 1], [], []>} : vector<2x74xf32>, vector<74x128xf32>, vector<2x128xf32> -> vector<2x128xf32>
    %c0_7 = arith.constant 0 : index
    %c0_8 = arith.constant 0 : index
    %8 = vector.load %arg8[%c0_7, %c0_8] : memref<1x128xf32, #tpu.memory_space<vmem>>, vector<1x128xf32>
    %9 = vector.broadcast %8 : vector<1x128xf32> to vector<2x128xf32>
    %10 = arith.addf %7, %9 : vector<2x128xf32>
    %c0_9 = arith.constant 0 : index
    %c0_10 = arith.constant 0 : index
    %11 = vector.load %arg2[%c0_9, %c0_10] : memref<2x4xf32, #tpu.memory_space<vmem>>, vector<2x4xf32>
    %c0_11 = arith.constant 0 : index
    %c0_12 = arith.constant 0 : index
    %12 = vector.load %arg7[%c0_11, %c0_12] : memref<4x128xf32, #tpu.memory_space<vmem>>, vector<4x128xf32>
    %13 = vector.extract_strided_slice %11 {offsets = [0, 0], sizes = [2, 1], strides = [1, 1]} : vector<2x4xf32> to vector<2x1xf32>
    %14 = vector.extract_strided_slice %12 {offsets = [0, 0], sizes = [1, 128], strides = [1, 1]} : vector<4x128xf32> to vector<1x128xf32>
    %15 = vector.broadcast %13 : vector<2x1xf32> to vector<2x128xf32>
    %16 = vector.broadcast %14 : vector<1x128xf32> to vector<2x128xf32>
    %17 = arith.mulf %15, %16 : vector<2x128xf32>
    %18 = arith.addf %10, %17 : vector<2x128xf32>
    %19 = vector.extract_strided_slice %11 {offsets = [0, 1], sizes = [2, 1], strides = [1, 1]} : vector<2x4xf32> to vector<2x1xf32>
    %20 = vector.extract_strided_slice %12 {offsets = [1, 0], sizes = [1, 128], strides = [1, 1]} : vector<4x128xf32> to vector<1x128xf32>
    %21 = vector.broadcast %19 : vector<2x1xf32> to vector<2x128xf32>
    %22 = vector.broadcast %20 : vector<1x128xf32> to vector<2x128xf32>
    %23 = arith.mulf %21, %22 : vector<2x128xf32>
    %24 = arith.addf %18, %23 : vector<2x128xf32>
    %25 = vector.extract_strided_slice %11 {offsets = [0, 2], sizes = [2, 1], strides = [1, 1]} : vector<2x4xf32> to vector<2x1xf32>
    %26 = vector.extract_strided_slice %12 {offsets = [2, 0], sizes = [1, 128], strides = [1, 1]} : vector<4x128xf32> to vector<1x128xf32>
    %27 = vector.broadcast %25 : vector<2x1xf32> to vector<2x128xf32>
    %28 = vector.broadcast %26 : vector<1x128xf32> to vector<2x128xf32>
    %29 = arith.mulf %27, %28 : vector<2x128xf32>
    %30 = arith.addf %24, %29 : vector<2x128xf32>
    %31 = vector.extract_strided_slice %11 {offsets = [0, 3], sizes = [2, 1], strides = [1, 1]} : vector<2x4xf32> to vector<2x1xf32>
    %32 = vector.extract_strided_slice %12 {offsets = [3, 0], sizes = [1, 128], strides = [1, 1]} : vector<4x128xf32> to vector<1x128xf32>
    %33 = vector.broadcast %31 : vector<2x1xf32> to vector<2x128xf32>
    %34 = vector.broadcast %32 : vector<1x128xf32> to vector<2x128xf32>
    %35 = arith.mulf %33, %34 : vector<2x128xf32>
    %36 = arith.addf %30, %35 : vector<2x128xf32>
    %c0_13 = arith.constant 0 : index
    %c0_14 = arith.constant 0 : index
    %37 = vector.load %arg9[%c0_13, %c0_14] : memref<1x128xf32, #tpu.memory_space<vmem>>, vector<1x128xf32>
    %38 = vector.broadcast %37 : vector<1x128xf32> to vector<2x128xf32>
    %39 = arith.addf %36, %38 : vector<2x128xf32>
    %c0_15 = arith.constant 0 : index
    %c0_16 = arith.constant 0 : index
    %40 = vector.load %arg3[%c0_15, %c0_16] : memref<2x128xf32, #tpu.memory_space<vmem>>, vector<2x128xf32>
    %41 = arith.addf %39, %40 : vector<2x128xf32>
    %42 = tpu.iota {dimensions = array<i32: 1>} : vector<2x128xi32>
    %c74_i32 = arith.constant 74 : i32
    %43 = vector.broadcast %c74_i32 : i32 to vector<2x128xi32>
    %44 = arith.cmpi slt, %42, %43 : vector<2x128xi32>
    %cst_17 = arith.constant -1.000000e+30 : f32
    %45 = vector.broadcast %cst_17 : f32 to vector<2x128xf32>
    %46 = arith.select %44, %41, %45 : vector<2x128xi1>, vector<2x128xf32>
    %cst_18 = arith.constant dense<0xFF800000> : vector<2xf32>
    %47 = vector.multi_reduction <maximumf>, %46, %cst_18 [1] : vector<2x128xf32> to vector<2xf32>
    %48 = vector.shape_cast %47 : vector<2xf32> to vector<2x1xf32>
    %49 = vector.broadcast %48 : vector<2x1xf32> to vector<2x128xf32>
    %50 = arith.subf %46, %49 : vector<2x128xf32>
    %51 = math.exp %50 : vector<2x128xf32>
    %cst_19 = arith.constant dense<0.000000e+00> : vector<2xf32>
    %52 = vector.multi_reduction <add>, %51, %cst_19 [1] : vector<2x128xf32> to vector<2xf32>
    %53 = vector.shape_cast %52 : vector<2xf32> to vector<2x1xf32>
    %54 = tpu.reciprocal %53 {approx = true} : vector<2x1xf32> -> vector<2x1xf32>
    %55 = vector.broadcast %54 : vector<2x1xf32> to vector<2x128xf32>
    %56 = arith.mulf %51, %55 : vector<2x128xf32>
    %c0_20 = arith.constant 0 : index
    %c0_21 = arith.constant 0 : index
    %57 = vector.load %arg4[%c0_20, %c0_21] : memref<2x128xf32, #tpu.memory_space<vmem>>, vector<2x128xf32>
    %58 = arith.mulf %56, %57 : vector<2x128xf32>
    %cst_22 = arith.constant dense<0.000000e+00> : vector<2xf32>
    %59 = vector.multi_reduction <add>, %58, %cst_22 [1] : vector<2x128xf32> to vector<2xf32>
    %60 = vector.shape_cast %59 : vector<2xf32> to vector<2x1xf32>
    %cst_23 = arith.constant 9.99999996E-13 : f32
    %61 = vector.broadcast %cst_23 : f32 to vector<2x1xf32>
    %62 = arith.maximumf %60, %61 : vector<2x1xf32>
    %63 = tpu.reciprocal %62 : vector<2x1xf32> -> vector<2x1xf32>
    %64 = vector.broadcast %63 : vector<2x1xf32> to vector<2x128xf32>
    %65 = arith.mulf %58, %64 : vector<2x128xf32>
    %c0_24 = arith.constant 0 : index
    %c0_25 = arith.constant 0 : index
    %66 = vector.load %arg10[%c0_24, %c0_25] : memref<2x128xf32, #tpu.memory_space<vmem>>, vector<2x128xf32>
    tpu.vector_store %arg10[%c0_24, %c0_25], %65 {strides = array<i32>} : memref<2x128xf32, #tpu.memory_space<vmem>>, vector<2x128xf32>,
    return
  }
  func.func @transform_0(%arg0: i32) -> (i32, i32, i32) {
    %c0_i32 = arith.constant 0 : i32
    %c0_i32_0 = arith.constant 0 : i32
    %c0_i32_1 = arith.constant 0 : i32
    return %arg0, %c0_i32, %c0_i32_0 : i32, i32, i32
  }
  func.func @transform_1(%arg0: i32) -> (i32, i32) {
    %c0_i32 = arith.constant 0 : i32
    %c0_i32_0 = arith.constant 0 : i32
    return %arg0, %c0_i32 : i32, i32
  }
  func.func @transform_2(%arg0: i32) -> (i32, i32) {
    %c0_i32 = arith.constant 0 : i32
    %c0_i32_0 = arith.constant 0 : i32
    return %arg0, %c0_i32 : i32, i32
  }
  func.func @transform_3(%arg0: i32) -> (i32, i32) {
    %c0_i32 = arith.constant 0 : i32
    %c0_i32_0 = arith.constant 0 : i32
    return %arg0, %c0_i32 : i32, i32
  }
  func.func @transform_4(%arg0: i32) -> (i32, i32) {
    %c0_i32 = arith.constant 0 : i32
    %c0_i32_0 = arith.constant 0 : i32
    %c0_i32_1 = arith.constant 0 : i32
    return %c0_i32, %c0_i32_0 : i32, i32
  }
  func.func @transform_5(%arg0: i32) -> (i32, i32) {
    %c0_i32 = arith.constant 0 : i32
    %c0_i32_0 = arith.constant 0 : i32
    %c0_i32_1 = arith.constant 0 : i32
    return %c0_i32, %c0_i32_0 : i32, i32
  }
  func.func @transform_6(%arg0: i32) -> (i32, i32) {
    %c0_i32 = arith.constant 0 : i32
    %c0_i32_0 = arith.constant 0 : i32
    %c0_i32_1 = arith.constant 0 : i32
    return %c0_i32, %c0_i32_0 : i32, i32
  }
  func.func @transform_7(%arg0: i32) -> (i32, i32) {
    %c0_i32 = arith.constant 0 : i32
    %c0_i32_0 = arith.constant 0 : i32
    %c0_i32_1 = arith.constant 0 : i32
    return %c0_i32, %c0_i32_0 : i32, i32
  }
  func.func @transform_8(%arg0: i32) -> (i32, i32) {
    %c0_i32 = arith.constant 0 : i32
    %c0_i32_0 = arith.constant 0 : i32
    %c0_i32_1 = arith.constant 0 : i32
    return %c0_i32, %c0_i32_0 : i32, i32
  }
  func.func @transform_9(%arg0: i32) -> (i32, i32) {
    %c0_i32 = arith.constant 0 : i32
    %c0_i32_0 = arith.constant 0 : i32
    return %arg0, %c0_i32 : i32, i32
  }
}

</mosaic_0001>

<llo_original>
// kernel: _forward_impl.1
$region0: #{_forward_impl.1}
  #allocation0 [shape = 'u32[]', space=smem, size = 0x4, offset = 0x4, fixed_abs, tag = 'smem constant byte address 0x4 - core index']
  #allocation1 [shape = 'u32[144,128]{1,0:T(1,128)}', space=vmem, size = 0x12000, scoped, tag = 'internal scratch']
  %s0 = inlined_call_operand.vmem [shape: f32[2,8,74], index: 0, kind: input, shape index: {}]
  %s1 = inlined_call_operand.vmem [shape: f32[2,4], index: 1, kind: input, shape index: {}]
  %s2 = inlined_call_operand.vmem [shape: f32[2,128], index: 2, kind: input, shape index: {}]
  %s3 = inlined_call_operand.vmem [shape: f32[2,128], index: 3, kind: input, shape index: {}]
  %s4 = inlined_call_operand.vmem [shape: f32[8,74], index: 4, kind: input, shape index: {}]
  %s5 = inlined_call_operand.hbm [shape: f32[74,128], index: 5, kind: input, shape index: {}]
  %s6 = inlined_call_operand.vmem [shape: f32[4,128], index: 6, kind: input, shape index: {}]
  %s7 = inlined_call_operand.vmem [shape: f32[1,128], index: 7, kind: input, shape index: {}]
  %s8 = inlined_call_operand.vmem [shape: f32[1,128], index: 8, kind: input, shape index: {}]
  %s9 = inlined_call_operand.hbm [shape: f32[2,128], index: 9, kind: output, shape index: {}]
  %s10 = sld [smem:[#allocation0]]
  $region50: #{_forward_impl.1} parent=0
    _
  %s12 = ssub.s32 1, %s10
  %s13 = scalar_select 0, %s12, %s10
  $region1: #{_forward_impl.1} parent=0
    #allocation2 [shape = 'u8[40960]{0}', space=vmem, size = 0xa000, scoped, tag = 'input window, operand 5, single buffered']
    #allocation3 [shape = 's32[1]{0}', space=sflag, size = 0x4, scoped, tag = 'scoped memory for _forward_impl.1']
    #allocation4 [shape = 's32[1]{0}', space=sflag, size = 0x4, scoped, tag = 'scoped memory for _forward_impl.1']
    #allocation5 [shape = 'u8[1024]{0}', space=vmem, size = 0x400, scoped, tag = 'output window, operand 0, single buffered']
    %14 = vsyncpa [#allocation3], 0
    %15 = vsyncpa [#allocation4], 0
    // Predicated region
    $region2: #{_forward_impl.1} parent=1 // pred_check
      _
    $region3: #{_forward_impl.1} parent=1 // pred_check_branch
      %17 = sbr.rel (0) target = $region5
    $region4: #{_forward_impl.1} parent=1 // pred_region
      _
    $region5: #{_forward_impl.1} parent=1 // pred_fallthru
      _
    // Predicated region
    $region6: #{_forward_impl.1} parent=1 // pred_check
      _
    $region7: #{_forward_impl.1} parent=1 // pred_check_branch
      %19 = sbr.rel (0) target = $region9
    $region8: #{_forward_impl.1} parent=1 // pred_region
      _
    $region9: #{_forward_impl.1} parent=1 // pred_fallthru
      _
    // Predicated region
    $region10: #{_forward_impl.1} parent=1 // pred_check
      _
    $region11: #{_forward_impl.1} parent=1 // pred_check_branch
      %21 = sbr.rel (0) target = $region13
    $region12: #{_forward_impl.1} parent=1 // pred_region
      _
    $region13: #{_forward_impl.1} parent=1 // pred_fallthru
      _
    // Predicated region
    $region14: #{_forward_impl.1} parent=1 // pred_check
      _
    $region15: #{_forward_impl.1} parent=1 // pred_check_branch
      %23 = sbr.rel (0) target = $region17
    $region16: #{_forward_impl.1} parent=1 // pred_region
      _
    $region17: #{_forward_impl.1} parent=1 // pred_fallthru
      _
    // Predicated region
    $region18: #{_forward_impl.1} parent=1 // pred_check
      _
    $region19: #{_forward_impl.1} parent=1 // pred_check_branch
      %25 = sbr.rel (0) target = $region21
    $region20: #{_forward_impl.1} parent=1 // pred_region
      _
    $region21: #{_forward_impl.1} parent=1 // pred_fallthru
      _
    // Predicated region
    $region22: #{_forward_impl.1} parent=1 // pred_check
      _
    $region23: #{_forward_impl.1} parent=1 // pred_check_branch
      %27 = sbr.rel (0) target = $region25
    $region24: #{_forward_impl.1} parent=1 // pred_region
      %s29 = ssub.s32 1280, 1280
      %30 = vsyncadd [#allocation3], %s29
      %s31 = sshll.u32 [#allocation2], 4
      %s32 = int_to_ptr.vmem [resolvable:$true] %s31
      %37 = dma.hbm_to_vmem [thread:$0]  %s5, 1280, %s32, [#allocation3], 128, 128, 8
    $region25: #{_forward_impl.1} parent=1 // pred_fallthru
      _
    // Predicated region
    $region26: #{_forward_impl.1} parent=1 // pred_check
      _
    $region27: #{_forward_impl.1} parent=1 // pred_check_branch
      %39 = sbr.rel (0) target = $region29
    $region28: #{_forward_impl.1} parent=1 // pred_region
      _
    $region29: #{_forward_impl.1} parent=1 // pred_fallthru
      _
    // Predicated region
    $region30: #{_forward_impl.1} parent=1 // pred_check
      _
    $region31: #{_forward_impl.1} parent=1 // pred_check_branch
      %41 = sbr.rel (0) target = $region33
    $region32: #{_forward_impl.1} parent=1 // pred_region
      _
    $region33: #{_forward_impl.1} parent=1 // pred_fallthru
      _
    // Predicated region
    $region34: #{_forward_impl.1} parent=1 // pred_check
      _
    $region35: #{_forward_impl.1} parent=1 // pred_check_branch
      %43 = sbr.rel (0) target = $region37
    $region36: #{_forward_impl.1} parent=1 // pred_region
      _
    $region37: #{_forward_impl.1} parent=1 // pred_fallthru
      _
    // Predicated region
    $region38: #{_forward_impl.1} parent=1 // pred_check
      _
    $region39: #{_forward_impl.1} parent=1 // pred_check_branch
      %45 = sbr.rel (0) target = $region41
    $region40: #{_forward_impl.1} parent=1 // pred_region
      %46 = dma.done [#allocation3], 1280
    $region41: #{_forward_impl.1} parent=1 // pred_fallthru
      _
    %v47 = vld [vmem:[%s0] sm:$0xff]
    %v48 = vld [vmem:[%s0 + $0x8] sm:$0xff]
    %v49 = vld [vmem:[%s4] sm:$0xff]
    %v50 = vmul.f32 %v47, %v49
    %v51 = vmul.f32 %v48, %v49
    %vm52 = vcmask 605184
    %v53 = vsel %vm52, %v50, 0.0
    %v54 = vrot.slane %v53, 4
    %v55 = vadd.f32 %v53, %v54
    %v56 = vrot.slane %v55, 2
    %v57 = vadd.f32 %v55, %v56
    %v58 = vrot.slane %v57, 1
    %v59 = vadd.f32 %v57, %v58
    %v60 = vsel %vm52, %v51, 0.0
    %v61 = vrot.slane %v60, 4
    %v62 = vadd.f32 %v60, %v61
    %v63 = vrot.slane %v62, 2
    %v64 = vadd.f32 %v62, %v63
    %v65 = vrot.slane %v64, 1
    %v66 = vadd.f32 %v64, %v65
    %v67 = vld [vmem:[#allocation2] sm:$0xff]
    %v68 = vld [vmem:[#allocation2 + $0x8] sm:$0xff]
    %v69 = vld [vmem:[#allocation2 + $0x10] sm:$0xff]
    %v70 = vld [vmem:[#allocation2 + $0x18] sm:$0xff]
    %v71 = vld [vmem:[#allocation2 + $0x20] sm:$0xff]
    %v72 = vld [vmem:[#allocation2 + $0x28] sm:$0xff]
    %v73 = vld [vmem:[#allocation2 + $0x30] sm:$0xff]
    %v74 = vld [vmem:[#allocation2 + $0x38] sm:$0xff]
    %v75 = vld [vmem:[#allocation2 + $0x40] sm:$0xff]
    %v76 = vld [vmem:[#allocation2 + $0x48] sm:$0x3]
    %v77 = vld [vmem:[%s7] sm:$0x1]
    %v79 = vlaneseq
    %v80 = vshrl.u32 %v79, 7
    %v81 = vsub.s32 0, %v80
    %v82 = vrot.slane %v77, %v81
    %vm86 = vcmask 1041409
    %v87 = vsel %vm86, %v66, %v59
    %v88 = vsel %vm52, %v87, 0
    %vm90 = vcmask 1041408
    %v92 = vsel %vm90, %v76, 0
    %94 = vmatprep.subr.mxu0 0.0
    %95 = vmatpush1.msra.mxu0 0.0
    %96 = vmatprep.subr.mxu0 0.0
    %97 = vmatpush1.msra.mxu0 0.0
    %98 = vmatprep.subr.mxu0 0.0
    %99 = vmatpush1.msra.mxu0 0.0
    %100 = vmatprep.subr.mxu0 0.0
    %101 = vmatpush1.msra.mxu0 0.0
    %102 = vmatprep.subr.mxu0 0.0
    %103 = vmatpush1.msra.mxu0 0.0
    %104 = vmatprep.subr.mxu0 0.0
    %105 = vmatpush1.msra.mxu0 0.0
    %106 = vmatprep.subr.mxu0 0.0
    %107 = vmatpush1.msra.mxu0 %v92
    %108 = vmatprep.subr.mxu0 0.0
    %109 = vmatpush1.msra.mxu0 %v75
    %110 = vmatprep.subr.mxu0 0.0
    %111 = vmatpush1.msra.mxu0 %v74
    %112 = vmatprep.subr.mxu0 0.0
    %113 = vmatpush1.msra.mxu0 %v73
    %114 = vmatprep.subr.mxu0 0.0
    %115 = vmatpush1.msra.mxu0 %v72
    %116 = vmatprep.subr.mxu0 0.0
    %117 = vmatpush1.msra.mxu0 %v71
    %118 = vmatprep.subr.mxu0 0.0
    %119 = vmatpush1.msra.mxu0 %v70
    %120 = vmatprep.subr.mxu0 0.0
    %121 = vmatpush1.msra.mxu0 %v69
    %122 = vmatprep.subr.mxu0 0.0
    %123 = vmatpush1.msra.mxu0 %v68
    %124 = vmatprep.subr.mxu0 0.0
    %125 = vmatpush1.msra.mxu0 %v67
    %126 = vmatprep.subr.mxu0 0.0
    %127 = vmatpush2.msra.mxu0 0.0
    %128 = vmatprep.subr.mxu0 0.0
    %129 = vmatpush2.msra.mxu0 0.0
    %130 = vmatprep.subr.mxu0 0.0
    %131 = vmatpush2.msra.mxu0 0.0
    %132 = vmatprep.subr.mxu0 0.0
    %133 = vmatpush2.msra.mxu0 0.0
    %134 = vmatprep.subr.mxu0 0.0
    %135 = vmatpush2.msra.mxu0 0.0
    %136 = vmatprep.subr.mxu0 0.0
    %137 = vmatpush2.msra.mxu0 0.0
    %138 = vmatprep.subr.mxu0 0.0
    %139 = vmatpush2.msra.mxu0 0.0
    %140 = vmatprep.subr.mxu0 0.0
    %141 = vmatpush2.msra.mxu0 0.0
    %142 = vmatprep.subr.mxu0 0.0
    %143 = vmatpush2.msra.mxu0 0.0
    %144 = vmatprep.subr.mxu0 0.0
    %145 = vmatpush2.msra.mxu0 0.0
    %146 = vmatprep.subr.mxu0 0.0
    %147 = vmatpush2.msra.mxu0 0.0
    %148 = vmatprep.subr.mxu0 0.0
    %149 = vmatpush2.msra.mxu0 0.0
    %150 = vmatprep.subr.mxu0 0.0
    %151 = vmatpush2.msra.mxu0 0.0
    %152 = vmatprep.subr.mxu0 0.0
    %153 = vmatpush2.msra.mxu0 0.0
    %154 = vmatprep.subr.mxu0 0.0
    %155 = vmatpush2.msra.mxu0 0.0
    %156 = vmatprep.subr.mxu0 0.0
    %157 = vmatpush2.msra.mxu0 0.0
    %158 = vmatprep.mubr.f32.mxu0 0.0
    %159 = vmatmul.mubr.f32.gmra.mxu0 %v88
    %v160 = vpop.f32.mrf.mxu0
    %v161 = vadd.f32 %v82, %v160
    %v162 = vpop.f32.mrf.mxu0
    %163 = vdwg.mxu0
    %v164 = vld [vmem:[%s1] sm:$0x3]
    %v165 = vld [vmem:[%s6] sm:$0xf]
    %167 = vset.pattern.permute.xlu0 0
    %168 = vperm.xlu0 %167, %v164
    %v169 = vpop.permute.xlu0 %168
    %v171 = vlaneseq
    %v172 = vshrl.u32 %v171, 7
    %v173 = vsub.s32 0, %v172
    %v174 = vrot.slane %v165, %v173
    %v175 = vmul.f32 %v169, %v174
    %v176 = vadd.f32 %v161, %v175
    %177 = vset.pattern.permute.xlu0 1
    %178 = vperm.xlu0 %177, %v164
    %v179 = vpop.permute.xlu0 %178
    %v181 = vlaneseq
    %v182 = vshrl.u32 %v181, 7
    %v183 = vsub.s32 1, %v182
    %v184 = vrot.slane %v165, %v183
    %v185 = vmul.f32 %v179, %v184
    %v186 = vadd.f32 %v176, %v185
    %187 = vset.pattern.permute.xlu0 2
    %188 = vperm.xlu0 %187, %v164
    %v189 = vpop.permute.xlu0 %188
    %v191 = vlaneseq
    %v192 = vshrl.u32 %v191, 7
    %v193 = vsub.s32 2, %v192
    %v194 = vrot.slane %v165, %v193
    %v195 = vmul.f32 %v189, %v194
    %v196 = vadd.f32 %v186, %v195
    %197 = vset.pattern.permute.xlu0 3
    %198 = vperm.xlu0 %197, %v164
    %v199 = vpop.permute.xlu0 %198
    %v201 = vlaneseq
    %v202 = vshrl.u32 %v201, 7
    %v203 = vsub.s32 3, %v202
    %v204 = vrot.slane %v165, %v203
    %v205 = vmul.f32 %v199, %v204
    %v206 = vadd.f32 %v196, %v205
    %v207 = vld [vmem:[%s8] sm:$0x1]
    %v209 = vlaneseq
    %v210 = vshrl.u32 %v209, 7
    %v211 = vsub.s32 0, %v210
    %v212 = vrot.slane %v207, %v211
    %v214 = vadd.f32 %v206, %v212
    %v215 = vld [vmem:[%s2] sm:$0x3]
    %v216 = vadd.f32 %v214, %v215
    %v217 = vlaneseq
    %v218 = vand.u32 %v217, 127
    %vm219 = vcmp.lt.s32.totalorder %v218, 74
    %v220 = vsel %vm219, %v216, -1e+30
    %v221 = vsel %vm90, %v220, -inf
    %222 = vmax.xlane.f32.xlu0 %v221
    %v223 = vpop.xlane.xlu0 %222
    %v224 = vsub.f32 %v220, %v223
    %v225 = vmul.f32 %v224, 1.442695
    %v226 = vpow.pop %v225
    %v227 = vsel %vm90, %v226, 0.0
    %228 = vadd.xlane.f32.xlu0 %v227
    %v229 = vpop.xlane.xlu0 %228
    %v230 = vrcp.pop %v229
    %v231 = vmul.f32 %v226, %v230
    %v232 = vld [vmem:[%s3] sm:$0x3]
    %v233 = vmul.f32 %v231, %v232
    %v234 = vsel %vm90, %v233, 0.0
    %235 = vadd.xlane.f32.xlu0 %v234
    %v236 = vpop.xlane.xlu0 %235
    %v237 = vmax.f32 %v236, 1e-12
    %v238 = vrcp.pop %v237
    %v239 = vmul.f32 %v233, %v238
    %240 = vst [vmem:[#allocation5] sm:$0x3] %v239
    // Predicated region
    $region42: #{_forward_impl.1} parent=1 // pred_check
      _
    $region43: #{_forward_impl.1} parent=1 // pred_check_branch
      %242 = sbr.rel (0) target = $region45
    $region44: #{_forward_impl.1} parent=1 // pred_region
      %s244 = ssub.s32 32, 32
      %245 = vsyncadd [#allocation4], %s244
      %s247 = sshll.u32 [#allocation5], 4
      %s248 = int_to_ptr.vmem [resolvable:$true] %s247
      %250 = dma.vmem_to_hbm [thread:$0]  %s248, 32, %s9, [#allocation4]
    $region45: #{_forward_impl.1} parent=1 // pred_fallthru
      _
    // Predicated region
    $region46: #{_forward_impl.1} parent=1 // pred_check
      _
    $region47: #{_forward_impl.1} parent=1 // pred_check_branch
      %252 = sbr.rel (0) target = $region49
    $region48: #{_forward_impl.1} parent=1 // pred_region
      %253 = dma.done [#allocation4], 32
    $region49: #{_forward_impl.1} parent=1 // pred_fallthru
      _
    %254 = vsyncpa [#allocation3], 1
    %255 = vsyncpa [#allocation4], 1

</llo_original>
